<compile_context>
chip_gen: v6e
topology: v6e:2x2x1
jax: 0.10.0
libtpu: 0.0.40
codegen_flags: <defaults>
</compile_context>

<pallas_src>
import jax
import jax.numpy as jnp
from jax import lax
from jax.experimental import pallas as pl
from jax.experimental.pallas import tpu as pltpu

IN_DIM = 78
HID_DIM = 128
OUT_DIM = 1


def mlp_nids_kernel(x_ref, w1_ref, b1_ref, w2_ref, b2_ref, o_ref):
    x = x_ref[...]                                            # (tb, 78)

    # ---- Layer 1 on the MXU, f32 accumulation -------------------------------
    # Cast W1 to x's dtype so bf16 inputs stay on the bf16 MXU path (no-op for
    # the default f32 inputs).
    w1 = w1_ref[...].astype(x.dtype)
    h = jnp.dot(x, w1, preferred_element_type=jnp.float32)    # (tb, 128) f32
    h = h + b1_ref[...].astype(jnp.float32)

    # ---- LeakyReLU(0.2) in f32 on the VPU -----------------------------------
    h = jnp.where(h > 0, h, 0.2 * h)

    # ---- Layer 2 as a lane-dense row ----------------------------------------
    # Contract the hidden (lane) axis of h against the (out=1, in=128) weight —
    # the same q@k^T contraction pattern the MXU handles natively.  The single
    # output row is broadcast to 8 sublanes (free: the MXU processes 8 sublanes
    # per push anyway) so the matmul stays on standard >=8-sublane shapes.
    w2_rows = jnp.broadcast_to(w2_ref[...], (8, HID_DIM)).astype(h.dtype)
    y8 = lax.dot_general(
        w2_rows, h,
        dimension_numbers=(((1,), (1,)), ((), ())),
        preferred_element_type=jnp.float32,
    )                                                          # (8, tb), rows identical
    y = y8[0:1, :] + b2_ref[...].astype(jnp.float32)           # (1, tb)

    # ---- Sigmoid: EUP exp + EUP approximate reciprocal ----------------------
    sig = pl.reciprocal(1.0 + jnp.exp(-y), approx=True)        # (1, tb)
    o_ref[0] = sig.astype(o_ref.dtype)                         # o_ref is (1, 1, tb)


def _round_up(x, m):
    return ((x + m - 1) // m) * m


def mlp_nids_forward(x, w1, b1, w2, b2, *, tb=1024, vmem_limit_bytes=None):
    """Forward pass.  x: (B, 78); w1: (78, 128); b1: (1, 128); w2: (1, 128); b2: (1, 1)."""
    B = x.shape[0]
    assert x.shape[1] == IN_DIM

    # Clamp the batch tile: keep it a multiple of 8 (f32 sublane packing) and
    # no larger than the sublane-rounded batch, so tiny batches compile clean.
    tb = int(max(8, min(tb, _round_up(B, 8))))
    nt = pl.cdiv(B, tb)   # ragged tail handled by Pallas partial input blocks

    compiler_params = pltpu.CompilerParams(
        # Independent batch tiles -> both v7x TensorCores can take grid steps.
        dimension_semantics=("parallel",),
        # Default (None) is plenty for tb=1024 (~1.2 MiB/step).  Raise this when
        # pushing tb much larger (v5e scoped default is 16 MiB; budget against
        # v7x's 64 MiB physical VMEM).
        vmem_limit_bytes=vmem_limit_bytes,
    )

    out_rows = pl.pallas_call(
        mlp_nids_kernel,
        out_shape=jax.ShapeDtypeStruct((nt, 1, tb), jnp.float32),
        grid_spec=pltpu.PrefetchScalarGridSpec(
            num_scalar_prefetch=0,
            grid=(nt,),
            in_specs=[
                pl.BlockSpec((tb, IN_DIM), lambda i: (i, 0)),        # x tile (streamed)
                pl.BlockSpec((IN_DIM, HID_DIM), lambda i: (0, 0)),   # W1 (VMEM-resident)
                pl.BlockSpec((1, HID_DIM), lambda i: (0, 0)),        # b1
                pl.BlockSpec((1, HID_DIM), lambda i: (0, 0)),        # W2 (PyTorch (out,in))
                pl.BlockSpec((1, 1), lambda i: (0, 0)),              # b2
            ],
            out_specs=pl.BlockSpec((1, 1, tb), lambda i: (i, 0, 0)),  # lane-dense row
        ),
        compiler_params=compiler_params,
    )(x, w1, b1, w2, b2)

    # (nt, 1, tb) row-major == batch order; drop the padded tail, restore (B, 1).
    return out_rows.reshape(nt * tb)[:B].reshape(B, OUT_DIM)


def init_params(key):
    """Deterministic init matching nn.Linear's default: U(-1/sqrt(fan_in), +)."""
    k1, k2, k3, k4 = jax.random.split(key, 4)
    bound1 = 1.0 / jnp.sqrt(IN_DIM)
    bound2 = 1.0 / jnp.sqrt(HID_DIM)
    w1 = jax.random.uniform(k1, (IN_DIM, HID_DIM), jnp.float32, -bound1, bound1)
    b1 = jax.random.uniform(k2, (1, HID_DIM), jnp.float32, -bound1, bound1)
    w2 = jax.random.uniform(k3, (OUT_DIM, HID_DIM), jnp.float32, -bound2, bound2)
    b2 = jax.random.uniform(k4, (1, OUT_DIM), jnp.float32, -bound2, bound2)
    return w1, b1, w2, b2


def reference_forward(x, w1, b1, w2, b2):
    h = x.astype(jnp.float32) @ w1 + b1
    h = jnp.where(h > 0, h, 0.2 * h)
    y = h @ w2.T + b2
    return jax.nn.sigmoid(y)


if __name__ == "__main__":
    key = jax.random.PRNGKey(0)
    kx, kx2, kp = jax.random.split(key, 3)
    w1, b1, w2, b2 = init_params(kp)

    # Small single-tile case (exact fit, block == array).
    B = 16
    x = jax.random.normal(kx, (B, IN_DIM), jnp.float32)
    out = jax.block_until_ready(mlp_nids_forward(x, w1, b1, w2, b2))
    ref = reference_forward(x, w1, b1, w2, b2)
    assert out.shape == (B, OUT_DIM)
    # atol absorbs the EUP approximate-reciprocal in the sigmoid (<< 5e-3 abs).
    assert jnp.allclose(out, ref, atol=5e-3, rtol=0), "mismatch vs reference (B=16)"

    # Multi-tile + ragged tail (exercises the cdiv grid / partial last block).
    B2 = 2 * 1024 + 53
    x2 = jax.random.normal(kx2, (B2, IN_DIM), jnp.float32)
    out2 = jax.block_until_ready(mlp_nids_forward(x2, w1, b1, w2, b2, tb=1024))
    ref2 = reference_forward(x2, w1, b1, w2, b2)
    assert out2.shape == (B2, OUT_DIM)
    assert jnp.allclose(out2, ref2, atol=5e-3, rtol=0), "mismatch vs reference (ragged)"

    print("KERNEL_OK")
</pallas_src>

<mosaic_0001>
module attributes {stable_mosaic.version = 11 : i64} {
  func.func @mlp_nids_kernel(%arg0: i32, %arg1: memref<16x78xf32, #tpu.memory_space<vmem>>, %arg2: memref<78x128xf32, #tpu.memory_space<vmem>>, %arg3: memref<1x128xf32, #tpu.memory_space<vmem>>, %arg4: memref<1x128xf32, #tpu.memory_space<vmem>>, %arg5: memref<1x1xf32, #tpu.memory_space<vmem>>, %arg6: memref<1x1x16xf32, #tpu.memory_space<vmem>>) attributes {dimension_semantics = [#tpu.dimension_semantics<parallel>], iteration_bounds = array<i64: 1>, scalar_prefetch = 0 : i64, scratch_operands = 0 : i64, tpu.core_type = #tpu.core_type<tc>, window_params = [{transform_indices = @transform_0, window_bounds = array<i64: 16, 78>}, {pipeline_mode = #tpu.pipeline_mode<synchronous>, transform_indices = @transform_1, window_bounds = array<i64: 78, 128>}, {pipeline_mode = #tpu.pipeline_mode<synchronous>, transform_indices = @transform_2, window_bounds = array<i64: 1, 128>}, {pipeline_mode = #tpu.pipeline_mode<synchronous>, transform_indices = @transform_3, window_bounds = array<i64: 1, 128>}, {pipeline_mode = #tpu.pipeline_mode<synchronous>, transform_indices = @transform_4, window_bounds = array<i64: 1, 1>}, {transform_indices = @transform_5, window_bounds = array<i64: 1, 1, 16>}]} {
    %c0 = arith.constant 0 : index
    %c0_0 = arith.constant 0 : index
    %0 = vector.load %arg1[%c0, %c0_0] : memref<16x78xf32, #tpu.memory_space<vmem>>, vector<16x78xf32>
    %c0_1 = arith.constant 0 : index
    %c0_2 = arith.constant 0 : index
    %1 = vector.load %arg2[%c0_1, %c0_2] : memref<78x128xf32, #tpu.memory_space<vmem>>, vector<78x128xf32>
    %cst = arith.constant dense<0.000000e+00> : vector<16x128xf32>
    %2 = tpu.matmul %0, %1, %cst {dimension_numbers = #tpu.dot_dimension_numbers<[1], [0], [0], [1], [0, 0, 1, 1], [], []>} : vector<16x78xf32>, vector<78x128xf32>, vector<16x128xf32> -> vector<16x128xf32>
    %c0_3 = arith.constant 0 : index
    %c0_4 = arith.constant 0 : index
    %3 = vector.load %arg3[%c0_3, %c0_4] : memref<1x128xf32, #tpu.memory_space<vmem>>, vector<1x128xf32>
    %4 = vector.broadcast %3 : vector<1x128xf32> to vector<16x128xf32>
    %5 = arith.addf %2, %4 : vector<16x128xf32>
    %cst_5 = arith.constant 0.000000e+00 : f32
    %6 = vector.broadcast %cst_5 : f32 to vector<16x128xf32>
    %7 = arith.cmpf ogt, %5, %6 : vector<16x128xf32>
    %cst_6 = arith.constant 2.000000e-01 : f32
    %8 = vector.broadcast %cst_6 : f32 to vector<16x128xf32>
    %9 = arith.mulf %8, %5 : vector<16x128xf32>
    %10 = arith.select %7, %5, %9 : vector<16x128xi1>, vector<16x128xf32>
    %c0_7 = arith.constant 0 : index
    %c0_8 = arith.constant 0 : index
    %11 = vector.load %arg4[%c0_7, %c0_8] : memref<1x128xf32, #tpu.memory_space<vmem>>, vector<1x128xf32>
    %12 = vector.shape_cast %11 : vector<1x128xf32> to vector<1x128xf32>
    %13 = vector.broadcast %12 : vector<1x128xf32> to vector<8x128xf32>
    %cst_9 = arith.constant dense<0.000000e+00> : vector<8x16xf32>
    %14 = tpu.matmul %13, %10, %cst_9 {dimension_numbers = #tpu.dot_dimension_numbers<[1], [1], [0], [0], [0, 0, 1, 0], [], []>} : vector<8x128xf32>, vector<16x128xf32>, vector<8x16xf32> -> vector<8x16xf32>
    %15 = vector.extract_strided_slice %14 {offsets = [0, 0], sizes = [1, 16], strides = [1, 1]} : vector<8x16xf32> to vector<1x16xf32>
    %c0_10 = arith.constant 0 : index
    %c0_11 = arith.constant 0 : index
    %16 = vector.load %arg5[%c0_10, %c0_11] : memref<1x1xf32, #tpu.memory_space<vmem>>, vector<1x1xf32>
    %17 = vector.broadcast %16 : vector<1x1xf32> to vector<1x16xf32>
    %18 = arith.addf %15, %17 : vector<1x16xf32>
    %cst_12 = arith.constant 0.000000e+00 : f32
    %19 = vector.broadcast %cst_12 : f32 to vector<1x16xf32>
    %20 = arith.subf %19, %18 : vector<1x16xf32>
    %21 = math.exp %20 : vector<1x16xf32>
    %cst_13 = arith.constant 1.000000e+00 : f32
    %22 = vector.broadcast %cst_13 : f32 to vector<1x16xf32>
    %23 = arith.addf %22, %21 : vector<1x16xf32>
    %24 = tpu.reciprocal %23 {approx = true} : vector<1x16xf32> -> vector<1x16xf32>
    %c0_14 = arith.constant 0 : index
    %c0_15 = arith.constant 0 : index
    %c0_16 = arith.constant 0 : index
    %25 = vector.load %arg6[%c0_14, %c0_15, %c0_16] : memref<1x1x16xf32, #tpu.memory_space<vmem>>, vector<1x1x16xf32>
    %26 = vector.shape_cast %25 : vector<1x1x16xf32> to vector<1x16xf32>
    %27 = vector.shape_cast %24 : vector<1x16xf32> to vector<1x1x16xf32>
    tpu.vector_store %arg6[%c0_14, %c0_15, %c0_16], %27 {strides = array<i32>} : memref<1x1x16xf32, #tpu.memory_space<vmem>>, vector<1x1x16xf32>,
    return
  }
  func.func @transform_0(%arg0: i32) -> (i32, i32) {
    %c0_i32 = arith.constant 0 : i32
    %c0_i32_0 = arith.constant 0 : i32
    return %arg0, %c0_i32 : i32, i32
  }
  func.func @transform_1(%arg0: i32) -> (i32, i32) {
    %c0_i32 = arith.constant 0 : i32
    %c0_i32_0 = arith.constant 0 : i32
    %c0_i32_1 = arith.constant 0 : i32
    return %c0_i32, %c0_i32_0 : i32, i32
  }
  func.func @transform_2(%arg0: i32) -> (i32, i32) {
    %c0_i32 = arith.constant 0 : i32
    %c0_i32_0 = arith.constant 0 : i32
    %c0_i32_1 = arith.constant 0 : i32
    return %c0_i32, %c0_i32_0 : i32, i32
  }
  func.func @transform_3(%arg0: i32) -> (i32, i32) {
    %c0_i32 = arith.constant 0 : i32
    %c0_i32_0 = arith.constant 0 : i32
    %c0_i32_1 = arith.constant 0 : i32
    return %c0_i32, %c0_i32_0 : i32, i32
  }
  func.func @transform_4(%arg0: i32) -> (i32, i32) {
    %c0_i32 = arith.constant 0 : i32
    %c0_i32_0 = arith.constant 0 : i32
    %c0_i32_1 = arith.constant 0 : i32
    return %c0_i32, %c0_i32_0 : i32, i32
  }
  func.func @transform_5(%arg0: i32) -> (i32, i32, i32) {
    %c0_i32 = arith.constant 0 : i32
    %c0_i32_0 = arith.constant 0 : i32
    %c0_i32_1 = arith.constant 0 : i32
    return %arg0, %c0_i32, %c0_i32_0 : i32, i32, i32
  }
}

</mosaic_0001>

<llo_original>
// kernel: tpu_custom_call.1
$region0: #{tpu_custom_call.1}
  #allocation0 [shape = 'u32[]', space=smem, size = 0x4, offset = 0x4, fixed_abs, tag = 'smem constant byte address 0x4 - core index']
  #allocation1 [shape = 'u32[144,128]{1,0:T(1,128)}', space=vmem, size = 0x12000, scoped, tag = 'internal scratch']
  #allocation2 [shape = 'f32[1,1]{1,0:T(1,128)S(1)}', space=vmem, size = 0x200, scoped, tag = 'scoped memory for tpu_custom_call.1']
  %s0 = inlined_call_operand.hbm [shape: f32[16,78], index: 0, kind: input, shape index: {}]
  %s1 = inlined_call_operand.hbm [shape: f32[78,128], index: 1, kind: input, shape index: {}]
  %s2 = inlined_call_operand.vmem [shape: f32[1,128], index: 2, kind: input, shape index: {}]
  %s3 = inlined_call_operand.vmem [shape: f32[1,128], index: 3, kind: input, shape index: {}]
  %s4 = inlined_call_operand.<no memory space> [shape: f32[1,1], index: 4, kind: input, shape index: {}]
  %s5 = inlined_call_operand.hbm [shape: f32[1,1,16], index: 5, kind: output, shape index: {}]
  %s6 = sld [smem:[#allocation0]]
  $region38: #{tpu_custom_call.1} parent=0
    _
  %s8 = ssub.s32 1, %s6
  %s9 = scalar_select 0, %s8, %s6
  %v10 = vstv %s4
  %11 = vst [vmem:[#allocation2] sm:$0x1] %v10
  $region1: #{tpu_custom_call.1} parent=0
    #allocation3 [shape = 'u8[8192]{0}', space=vmem, size = 0x2000, scoped, tag = 'input window, operand 0, single buffered']
    #allocation4 [shape = 's32[1]{0}', space=sflag, size = 0x4, scoped, tag = 'scoped memory for tpu_custom_call.1']
    #allocation5 [shape = 's32[1]{0}', space=sflag, size = 0x4, scoped, tag = 'scoped memory for tpu_custom_call.1']
    #allocation6 [shape = 'u8[40960]{0}', space=vmem, size = 0xa000, scoped, tag = 'input window, operand 1, single buffered']
    #allocation7 [shape = 's32[1]{0}', space=sflag, size = 0x4, scoped, tag = 'scoped memory for tpu_custom_call.1']
    #allocation8 [shape = 'u8[512]{0}', space=vmem, size = 0x400, scoped, tag = 'output window, operand 0, single buffered']
    %12 = vsyncpa [#allocation4], 0
    %13 = vsyncpa [#allocation7], 0
    %14 = vsyncpa [#allocation5], 0
    // Predicated region
    $region2: #{tpu_custom_call.1} parent=1 // pred_check
      _
    $region3: #{tpu_custom_call.1} parent=1 // pred_check_branch
      %16 = sbr.rel (0) target = $region5
    $region4: #{tpu_custom_call.1} parent=1 // pred_region
      %s18 = ssub.s32 256, 256
      %19 = vsyncadd [#allocation4], %s18
      %s20 = sshll.u32 [#allocation3], 4
      %s21 = int_to_ptr.vmem [resolvable:$true] %s20
      %26 = dma.hbm_to_vmem [thread:$0]  %s0, 256, %s21, [#allocation4], 128, 128, 8
    $region5: #{tpu_custom_call.1} parent=1 // pred_fallthru
      _
    // Predicated region
    $region6: #{tpu_custom_call.1} parent=1 // pred_check
      _
    $region7: #{tpu_custom_call.1} parent=1 // pred_check_branch
      %28 = sbr.rel (0) target = $region9
    $region8: #{tpu_custom_call.1} parent=1 // pred_region
      %s30 = ssub.s32 1280, 1280
      %31 = vsyncadd [#allocation7], %s30
      %s32 = sshll.u32 [#allocation6], 4
      %s33 = int_to_ptr.vmem [resolvable:$true] %s32
      %38 = dma.hbm_to_vmem [thread:$0]  %s1, 1280, %s33, [#allocation7], 128, 128, 8
    $region9: #{tpu_custom_call.1} parent=1 // pred_fallthru
      _
    // Predicated region
    $region10: #{tpu_custom_call.1} parent=1 // pred_check
      _
    $region11: #{tpu_custom_call.1} parent=1 // pred_check_branch
      %40 = sbr.rel (0) target = $region13
    $region12: #{tpu_custom_call.1} parent=1 // pred_region
      _
    $region13: #{tpu_custom_call.1} parent=1 // pred_fallthru
      _
    // Predicated region
    $region14: #{tpu_custom_call.1} parent=1 // pred_check
      _
    $region15: #{tpu_custom_call.1} parent=1 // pred_check_branch
      %42 = sbr.rel (0) target = $region17
    $region16: #{tpu_custom_call.1} parent=1 // pred_region
      _
    $region17: #{tpu_custom_call.1} parent=1 // pred_fallthru
      _
    // Predicated region
    $region18: #{tpu_custom_call.1} parent=1 // pred_check
      _
    $region19: #{tpu_custom_call.1} parent=1 // pred_check_branch
      %44 = sbr.rel (0) target = $region21
    $region20: #{tpu_custom_call.1} parent=1 // pred_region
      _
    $region21: #{tpu_custom_call.1} parent=1 // pred_fallthru
      _
    // Predicated region
    $region22: #{tpu_custom_call.1} parent=1 // pred_check
      _
    $region23: #{tpu_custom_call.1} parent=1 // pred_check_branch
      %46 = sbr.rel (0) target = $region25
    $region24: #{tpu_custom_call.1} parent=1 // pred_region
      %47 = dma.done [#allocation4], 256
    $region25: #{tpu_custom_call.1} parent=1 // pred_fallthru
      _
    // Predicated region
    $region26: #{tpu_custom_call.1} parent=1 // pred_check
      _
    $region27: #{tpu_custom_call.1} parent=1 // pred_check_branch
      %49 = sbr.rel (0) target = $region29
    $region28: #{tpu_custom_call.1} parent=1 // pred_region
      %50 = dma.done [#allocation7], 1280
    $region29: #{tpu_custom_call.1} parent=1 // pred_fallthru
      _
    %v51 = vld [vmem:[#allocation3] sm:$0xff]
    %v52 = vld [vmem:[#allocation3 + $0x8] sm:$0xff]
    %v53 = vld [vmem:[#allocation6] sm:$0xff]
    %v54 = vld [vmem:[#allocation6 + $0x8] sm:$0xff]
    %v55 = vld [vmem:[#allocation6 + $0x10] sm:$0xff]
    %v56 = vld [vmem:[#allocation6 + $0x18] sm:$0xff]
    %v57 = vld [vmem:[#allocation6 + $0x20] sm:$0xff]
    %v58 = vld [vmem:[#allocation6 + $0x28] sm:$0xff]
    %v59 = vld [vmem:[#allocation6 + $0x30] sm:$0xff]
    %v60 = vld [vmem:[#allocation6 + $0x38] sm:$0xff]
    %v61 = vld [vmem:[#allocation6 + $0x40] sm:$0xff]
    %v62 = vld [vmem:[#allocation6 + $0x48] sm:$0x3f]
    %v63 = vld [vmem:[%s2] sm:$0x1]
    %v65 = vlaneseq
    %v66 = vshrl.u32 %v65, 7
    %v67 = vsub.s32 0, %v66
    %v68 = vrot.slane %v63, %v67
    %vm70 = vcmask 637952
    %v72 = vsel %vm70, %v51, 0
    %v75 = vsel %vm70, %v52, 0
    %vm77 = vcmask 1045504
    %v79 = vsel %vm77, %v62, 0
    %81 = vmatprep.subr.mxu0 0.0
    %82 = vmatpush1.msra.mxu0 0.0
    %83 = vmatprep.subr.mxu0 0.0
    %84 = vmatpush1.msra.mxu0 0.0
    %85 = vmatprep.subr.mxu0 0.0
    %86 = vmatpush1.msra.mxu0 0.0
    %87 = vmatprep.subr.mxu0 0.0
    %88 = vmatpush1.msra.mxu0 0.0
    %89 = vmatprep.subr.mxu0 0.0
    %90 = vmatpush1.msra.mxu0 0.0
    %91 = vmatprep.subr.mxu0 0.0
    %92 = vmatpush1.msra.mxu0 0.0
    %93 = vmatprep.subr.mxu0 0.0
    %94 = vmatpush1.msra.mxu0 %v79
    %95 = vmatprep.subr.mxu0 0.0
    %96 = vmatpush1.msra.mxu0 %v61
    %97 = vmatprep.subr.mxu0 0.0
    %98 = vmatpush1.msra.mxu0 %v60
    %99 = vmatprep.subr.mxu0 0.0
    %100 = vmatpush1.msra.mxu0 %v59
    %101 = vmatprep.subr.mxu0 0.0
    %102 = vmatpush1.msra.mxu0 %v58
    %103 = vmatprep.subr.mxu0 0.0
    %104 = vmatpush1.msra.mxu0 %v57
    %105 = vmatprep.subr.mxu0 0.0
    %106 = vmatpush1.msra.mxu0 %v56
    %107 = vmatprep.subr.mxu0 0.0
    %108 = vmatpush1.msra.mxu0 %v55
    %109 = vmatprep.subr.mxu0 0.0
    %110 = vmatpush1.msra.mxu0 %v54
    %111 = vmatprep.subr.mxu0 0.0
    %112 = vmatpush1.msra.mxu0 %v53
    %113 = vmatprep.subr.mxu0 0.0
    %114 = vmatpush2.msra.mxu0 0.0
    %115 = vmatprep.subr.mxu0 0.0
    %116 = vmatpush2.msra.mxu0 0.0
    %117 = vmatprep.subr.mxu0 0.0
    %118 = vmatpush2.msra.mxu0 0.0
    %119 = vmatprep.subr.mxu0 0.0
    %120 = vmatpush2.msra.mxu0 0.0
    %121 = vmatprep.subr.mxu0 0.0
    %122 = vmatpush2.msra.mxu0 0.0
    %123 = vmatprep.subr.mxu0 0.0
    %124 = vmatpush2.msra.mxu0 0.0
    %125 = vmatprep.subr.mxu0 0.0
    %126 = vmatpush2.msra.mxu0 0.0
    %127 = vmatprep.subr.mxu0 0.0
    %128 = vmatpush2.msra.mxu0 0.0
    %129 = vmatprep.subr.mxu0 0.0
    %130 = vmatpush2.msra.mxu0 0.0
    %131 = vmatprep.subr.mxu0 0.0
    %132 = vmatpush2.msra.mxu0 0.0
    %133 = vmatprep.subr.mxu0 0.0
    %134 = vmatpush2.msra.mxu0 0.0
    %135 = vmatprep.subr.mxu0 0.0
    %136 = vmatpush2.msra.mxu0 0.0
    %137 = vmatprep.subr.mxu0 0.0
    %138 = vmatpush2.msra.mxu0 0.0
    %139 = vmatprep.subr.mxu0 0.0
    %140 = vmatpush2.msra.mxu0 0.0
    %141 = vmatprep.subr.mxu0 0.0
    %142 = vmatpush2.msra.mxu0 0.0
    %143 = vmatprep.subr.mxu0 0.0
    %144 = vmatpush2.msra.mxu0 0.0
    %145 = vmatprep.mubr.f32.mxu0 0.0
    %146 = vmatmul.mubr.f32.gmra.mxu0 %v72
    %v147 = vpop.f32.mrf.mxu0
    %v148 = vadd.f32 %v68, %v147
    %v149 = vpop.f32.mrf.mxu0
    %150 = vmatprep.mubr.f32.mxu0 0.0
    %151 = vmatmul.mubr.f32.gmra.mxu0 %v75
    %v152 = vpop.f32.mrf.mxu0
    %v153 = vadd.f32 %v68, %v152
    %v154 = vpop.f32.mrf.mxu0
    %155 = vdwg.mxu0
    %vm156 = vcmp.gt.f32.partialorder %v148, 0.0
    %vm157 = vcmp.gt.f32.partialorder %v153, 0.0
    %v158 = vmul.f32 %v148, 0.2
    %v159 = vmul.f32 %v153, 0.2
    %v160 = vsel %vm156, %v148, %v158
    %v161 = vsel %vm157, %v153, %v159
    %v162 = vld [vmem:[%s3] sm:$0x1]
    %v164 = vlaneseq
    %v165 = vshrl.u32 %v164, 7
    %v166 = vsub.s32 0, %v165
    %v167 = vrot.slane %v162, %v166
    %169 = vmatprep.subr.mxu0 0.0
    %170 = vmatpush1.xpose.msra.mxu0 0.0
    %171 = vmatprep.subr.mxu0 0.0
    %172 = vmatpush1.xpose.msra.mxu0 0.0
    %173 = vmatprep.subr.mxu0 0.0
    %174 = vmatpush1.xpose.msra.mxu0 0.0
    %175 = vmatprep.subr.mxu0 0.0
    %176 = vmatpush1.xpose.msra.mxu0 0.0
    %177 = vmatprep.subr.mxu0 0.0
    %178 = vmatpush1.xpose.msra.mxu0 0.0
    %179 = vmatprep.subr.mxu0 0.0
    %180 = vmatpush1.xpose.msra.mxu0 0.0
    %181 = vmatprep.subr.mxu0 0.0
    %182 = vmatpush1.xpose.msra.mxu0 0.0
    %183 = vmatprep.subr.mxu0 0.0
    %184 = vmatpush1.xpose.msra.mxu0 0.0
    %185 = vmatprep.subr.mxu0 0.0
    %186 = vmatpush1.xpose.msra.mxu0 0.0
    %187 = vmatprep.subr.mxu0 0.0
    %188 = vmatpush1.xpose.msra.mxu0 0.0
    %189 = vmatprep.subr.mxu0 0.0
    %190 = vmatpush1.xpose.msra.mxu0 0.0
    %191 = vmatprep.subr.mxu0 0.0
    %192 = vmatpush1.xpose.msra.mxu0 0.0
    %193 = vmatprep.subr.mxu0 0.0
    %194 = vmatpush1.xpose.msra.mxu0 0.0
    %195 = vmatprep.subr.mxu0 0.0
    %196 = vmatpush1.xpose.msra.mxu0 0.0
    %197 = vmatprep.subr.mxu0 0.0
    %198 = vmatpush1.xpose.msra.mxu0 %v161
    %199 = vmatprep.subr.mxu0 0.0
    %200 = vmatpush1.xpose.msra.mxu0 %v160
    %201 = vmatprep.subr.mxu0 0.0
    %202 = vmatpush2.xpose.msra.mxu0 0.0
    %203 = vmatprep.subr.mxu0 0.0
    %204 = vmatpush2.xpose.msra.mxu0 0.0
    %205 = vmatprep.subr.mxu0 0.0
    %206 = vmatpush2.xpose.msra.mxu0 0.0
    %207 = vmatprep.subr.mxu0 0.0
    %208 = vmatpush2.xpose.msra.mxu0 0.0
    %209 = vmatprep.subr.mxu0 0.0
    %210 = vmatpush2.xpose.msra.mxu0 0.0
    %211 = vmatprep.subr.mxu0 0.0
    %212 = vmatpush2.xpose.msra.mxu0 0.0
    %213 = vmatprep.subr.mxu0 0.0
    %214 = vmatpush2.xpose.msra.mxu0 0.0
    %215 = vmatprep.subr.mxu0 0.0
    %216 = vmatpush2.xpose.msra.mxu0 0.0
    %217 = vmatprep.subr.mxu0 0.0
    %218 = vmatpush2.xpose.msra.mxu0 0.0
    %219 = vmatprep.subr.mxu0 0.0
    %220 = vmatpush2.xpose.msra.mxu0 0.0
    %221 = vmatprep.subr.mxu0 0.0
    %222 = vmatpush2.xpose.msra.mxu0 0.0
    %223 = vmatprep.subr.mxu0 0.0
    %224 = vmatpush2.xpose.msra.mxu0 0.0
    %225 = vmatprep.subr.mxu0 0.0
    %226 = vmatpush2.xpose.msra.mxu0 0.0
    %227 = vmatprep.subr.mxu0 0.0
    %228 = vmatpush2.xpose.msra.mxu0 0.0
    %229 = vmatprep.subr.mxu0 0.0
    %230 = vmatpush2.xpose.msra.mxu0 0.0
    %231 = vmatprep.subr.mxu0 0.0
    %232 = vmatpush2.xpose.msra.mxu0 0.0
    %233 = vmatprep.mubr.f32.mxu0 0.0
    %234 = vmatmul.mubr.f32.gmra.mxu0 %v167
    %v235 = vpop.f32.mrf.mxu0
    %v236 = vadd.f32 0.0, %v235
    %v237 = vpop.f32.mrf.mxu0
    %238 = vdwg.mxu0
    %v239 = vld [vmem:[#allocation2] sm:$0x1]
    %241 = vset.pattern.permute.xlu0 0
    %242 = vperm.xlu0 %241, %v239
    %v243 = vpop.permute.xlu0 %242
    %v245 = vlaneseq
    %v246 = vshrl.u32 %v245, 7
    %v247 = vsub.s32 0, %v246
    %v248 = vrot.slane %v243, %v247
    %v249 = vadd.f32 %v236, %v248
    %v250 = vsub.f32 0.0, %v249
    %v251 = vmul.f32 %v250, 1.442695
    %v252 = vpow.pop %v251
    %v253 = vadd.f32 %v252, 1.0
    %v254 = vrcp.pop %v253
    %vm255 = vcmask 122880
    %256 = vst.msk [vmem:[#allocation8] sm:$0x1] %vm255, %v254
    // Predicated region
    $region30: #{tpu_custom_call.1} parent=1 // pred_check
      _
    $region31: #{tpu_custom_call.1} parent=1 // pred_check_branch
      %258 = sbr.rel (0) target = $region33
    $region32: #{tpu_custom_call.1} parent=1 // pred_region
      %s260 = ssub.s32 16, 16
      %261 = vsyncadd [#allocation5], %s260
      %s263 = sshll.u32 [#allocation8], 4
      %s264 = int_to_ptr.vmem [resolvable:$true] %s263
      %266 = dma.vmem_to_hbm [thread:$0]  %s264, 16, %s5, [#allocation5]
    $region33: #{tpu_custom_call.1} parent=1 // pred_fallthru
      _
    // Predicated region
    $region34: #{tpu_custom_call.1} parent=1 // pred_check
      _
    $region35: #{tpu_custom_call.1} parent=1 // pred_check_branch
      %268 = sbr.rel (0) target = $region37
    $region36: #{tpu_custom_call.1} parent=1 // pred_region
      %269 = dma.done [#allocation5], 16
    $region37: #{tpu_custom_call.1} parent=1 // pred_fallthru
      _
    %270 = vsyncpa [#allocation4], 1
    %271 = vsyncpa [#allocation7], 1
    %272 = vsyncpa [#allocation5], 1

</llo_original>
